<compile_context>
chip_gen: v5e
topology: v5e:2x2
jax: 0.10.0
libtpu: 0.0.40
codegen_flags: <defaults>
</compile_context>

<pallas_src>
import jax
import jax.numpy as jnp
from jax.experimental import pallas as pl
from jax.experimental.pallas import tpu as pltpu


# ---------------------------------------------------------------------------
# Kernel
# ---------------------------------------------------------------------------
def dqn_kernel(x_ref, w1_ref, b1_ref, w2_ref, b2_ref, o_ref):
    # Two MXU matmuls + VPU bias/ReLU; all operands already resident in VMEM.
    x = x_ref[...].astype(w1_ref.dtype)                     # bf16 path: cast once
    h = jnp.dot(x, w1_ref[...], preferred_element_type=jnp.float32)
    h = jnp.maximum(h + b1_ref[...].astype(jnp.float32), 0.0)   # f32 bias + ReLU
    out = jnp.dot(h.astype(w2_ref.dtype), w2_ref[...],
                  preferred_element_type=jnp.float32)
    o_ref[...] = (out + b2_ref[...].astype(jnp.float32)).astype(o_ref.dtype)


# ---------------------------------------------------------------------------
# Helpers / wrappers
# ---------------------------------------------------------------------------
def _round_up(n, m):
    return ((n + m - 1) // m) * m


def prepare_dqn_params(w1, b1, w2, b2, *, dtype=None):
    """One-time (outside the hot loop) weight preparation.

    Takes PyTorch nn.Linear layout (out_features, in_features) and returns
    pre-transposed operands:
        w1p: (S, H)   b1p: (1, H)   w2p: (H, A)   b2p: (1, A)
    No lane padding: the MXU pass count is unchanged at these shapes and the
    kernel stores an A-wide output directly (masked vst, contiguous HBM DMA).
    Pass dtype=jnp.bfloat16 for the bf16 hot path on v6e/v7x.
    """
    w1 = jnp.asarray(w1)
    w2 = jnp.asarray(w2)
    dt = dtype if dtype is not None else w1.dtype

    w1p = w1.T.astype(dt)                         # (S, H)
    b1p = jnp.asarray(b1, dt).reshape(1, -1)      # (1, H)
    w2p = w2.T.astype(dt)                         # (H, A)
    b2p = jnp.asarray(b2, dt).reshape(1, -1)      # (1, A)
    return w1p, b1p, w2p, b2p


def dqn_forward(x, params, *, tile_b=4096):
    """x: (B, S) float; params: output of prepare_dqn_params. Returns (B, A)."""
    w1p, b1p, w2p, b2p = params
    B, S = x.shape
    H = w1p.shape[1]
    A = w2p.shape[1]

    # Batch tile: multiple of 8 (sublane), capped at tile_b, and capped at
    # ~B/2 so the parallel batch axis has >=2 grid steps (v7x megacore).
    half = _round_up(max(pl.cdiv(B, 2), 1), 8)
    tb = max(8, min(tile_b, half))
    grid = (pl.cdiv(B, tb),)          # no jnp.pad: Pallas masks the ragged tail

    # VMEM budget: double-buffered x block (lane-padded to 128 -> tb*512 B f32)
    # + double-buffered out block (tb*512 B) + headroom; keep <= 48 MiB (v7x).
    vmem_limit = int(max(16 << 20, min(48 << 20, tb * 4096 + (2 << 20))))

    itemsize = jnp.dtype(x.dtype).itemsize
    cost = pl.CostEstimate(
        flops=2 * B * (S * H + H * A),
        transcendentals=0,
        bytes_accessed=(B * S * itemsize                    # x read
                        + B * A * itemsize                  # out write
                        + sum(int(p.size) * jnp.dtype(p.dtype).itemsize
                              for p in (w1p, b1p, w2p, b2p))),
    )

    return pl.pallas_call(
        dqn_kernel,
        out_shape=jax.ShapeDtypeStruct((B, A), x.dtype),
        grid=grid,
        in_specs=[
            pl.BlockSpec((tb, S), lambda i: (i, 0)),    # batch-tiled activations
            pl.BlockSpec((S, H), lambda i: (0, 0)),     # weights resident in VMEM
            pl.BlockSpec((1, H), lambda i: (0, 0)),
            pl.BlockSpec((H, A), lambda i: (0, 0)),
            pl.BlockSpec((1, A), lambda i: (0, 0)),
        ],
        out_specs=pl.BlockSpec((tb, A), lambda i: (i, 0)),   # narrow A-wide store
        compiler_params=pltpu.CompilerParams(
            dimension_semantics=("parallel",),
            vmem_limit_bytes=vmem_limit),
        cost_estimate=cost,
    )(x, w1p, b1p, w2p, b2p)


def init_dqn_params(key, state_size, action_size, hidden_size=64,
                    dtype=jnp.float32):
    """Deterministic init matching the module's __init__ semantics:
    kaiming_uniform_ on weights (relu gain for fc1, linear gain for fc2),
    PyTorch default uniform(-1/sqrt(fan_in), 1/sqrt(fan_in)) on biases."""
    k1, k2, k3, k4 = jax.random.split(key, 4)

    # fc1: kaiming uniform, gain = sqrt(2) (relu), fan_in = state_size
    bound1 = (2.0 ** 0.5) * (3.0 / state_size) ** 0.5
    w1 = jax.random.uniform(k1, (hidden_size, state_size), dtype,
                            minval=-bound1, maxval=bound1)
    bb1 = 1.0 / (state_size ** 0.5)
    b1 = jax.random.uniform(k2, (hidden_size,), dtype, minval=-bb1, maxval=bb1)

    # fc2: kaiming uniform, gain = 1 (linear), fan_in = hidden_size
    bound2 = (3.0 / hidden_size) ** 0.5
    w2 = jax.random.uniform(k3, (action_size, hidden_size), dtype,
                            minval=-bound2, maxval=bound2)
    bb2 = 1.0 / (hidden_size ** 0.5)
    b2 = jax.random.uniform(k4, (action_size,), dtype, minval=-bb2, maxval=bb2)

    return w1, b1, w2, b2


if __name__ == "__main__":
    key = jax.random.PRNGKey(0)
    kx, kp = jax.random.split(key)

    batch = 8
    state_size = 16
    hidden_size = 64
    action_size = 4

    x = jax.random.normal(kx, (batch, state_size), jnp.float32)
    w1, b1, w2, b2 = init_dqn_params(kp, state_size, action_size, hidden_size)

    # One-time prep (transpose only); hot path only calls dqn_forward.
    # Keep f32 here so the reference check stays tight; for bulk inference on
    # v6e/v7x pass dtype=jnp.bfloat16 (accumulation stays f32).
    params = prepare_dqn_params(w1, b1, w2, b2)

    out = dqn_forward(x, params)
    out = jax.block_until_ready(out)

    # Reference check in plain JAX (same math as the PyTorch forward).
    ref = jnp.maximum(x @ w1.T + b1, 0.0) @ w2.T + b2
    assert out.shape == (batch, action_size)
    assert jnp.allclose(out, ref, atol=1e-5, rtol=1e-5)

    print("KERNEL_OK")
</pallas_src>

<mosaic_0001>
module attributes {stable_mosaic.version = 11 : i64} {
  func.func @dqn_kernel(%arg0: i32, %arg1: memref<8x16xf32, #tpu.memory_space<vmem>>, %arg2: memref<16x64xf32, #tpu.memory_space<vmem>>, %arg3: memref<1x64xf32, #tpu.memory_space<vmem>>, %arg4: memref<64x4xf32, #tpu.memory_space<vmem>>, %arg5: memref<1x4xf32, #tpu.memory_space<vmem>>, %arg6: memref<8x4xf32, #tpu.memory_space<vmem>>) attributes {dimension_semantics = [#tpu.dimension_semantics<parallel>], iteration_bounds = array<i64: 1>, scalar_prefetch = 0 : i64, scratch_operands = 0 : i64, tpu.core_type = #tpu.core_type<tc>, window_params = [{transform_indices = @transform_0, window_bounds = array<i64: 8, 16>}, {pipeline_mode = #tpu.pipeline_mode<synchronous>, transform_indices = @transform_1, window_bounds = array<i64: 16, 64>}, {pipeline_mode = #tpu.pipeline_mode<synchronous>, transform_indices = @transform_2, window_bounds = array<i64: 1, 64>}, {pipeline_mode = #tpu.pipeline_mode<synchronous>, transform_indices = @transform_3, window_bounds = array<i64: 64, 4>}, {pipeline_mode = #tpu.pipeline_mode<synchronous>, transform_indices = @transform_4, window_bounds = array<i64: 1, 4>}, {transform_indices = @transform_5, window_bounds = array<i64: 8, 4>}]} {
    %c0 = arith.constant 0 : index
    %c0_0 = arith.constant 0 : index
    %0 = vector.load %arg1[%c0, %c0_0] : memref<8x16xf32, #tpu.memory_space<vmem>>, vector<8x16xf32>
    %c0_1 = arith.constant 0 : index
    %c0_2 = arith.constant 0 : index
    %1 = vector.load %arg2[%c0_1, %c0_2] : memref<16x64xf32, #tpu.memory_space<vmem>>, vector<16x64xf32>
    %cst = arith.constant dense<0.000000e+00> : vector<8x64xf32>
    %2 = tpu.matmul %0, %1, %cst {dimension_numbers = #tpu.dot_dimension_numbers<[1], [0], [0], [1], [0, 0, 1, 1], [], []>} : vector<8x16xf32>, vector<16x64xf32>, vector<8x64xf32> -> vector<8x64xf32>
    %c0_3 = arith.constant 0 : index
    %c0_4 = arith.constant 0 : index
    %3 = vector.load %arg3[%c0_3, %c0_4] : memref<1x64xf32, #tpu.memory_space<vmem>>, vector<1x64xf32>
    %4 = vector.broadcast %3 : vector<1x64xf32> to vector<8x64xf32>
    %5 = arith.addf %2, %4 : vector<8x64xf32>
    %cst_5 = arith.constant 0.000000e+00 : f32
    %6 = vector.broadcast %cst_5 : f32 to vector<8x64xf32>
    %7 = arith.maximumf %5, %6 : vector<8x64xf32>
    %c0_6 = arith.constant 0 : index
    %c0_7 = arith.constant 0 : index
    %8 = vector.load %arg4[%c0_6, %c0_7] : memref<64x4xf32, #tpu.memory_space<vmem>>, vector<64x4xf32>
    %cst_8 = arith.constant dense<0.000000e+00> : vector<8x4xf32>
    %9 = tpu.matmul %7, %8, %cst_8 {dimension_numbers = #tpu.dot_dimension_numbers<[1], [0], [0], [1], [0, 0, 1, 1], [], []>} : vector<8x64xf32>, vector<64x4xf32>, vector<8x4xf32> -> vector<8x4xf32>
    %c0_9 = arith.constant 0 : index
    %c0_10 = arith.constant 0 : index
    %10 = vector.load %arg5[%c0_9, %c0_10] : memref<1x4xf32, #tpu.memory_space<vmem>>, vector<1x4xf32>
    %11 = vector.broadcast %10 : vector<1x4xf32> to vector<8x4xf32>
    %12 = arith.addf %9, %11 : vector<8x4xf32>
    %c0_11 = arith.constant 0 : index
    %c0_12 = arith.constant 0 : index
    %13 = vector.load %arg6[%c0_11, %c0_12] : memref<8x4xf32, #tpu.memory_space<vmem>>, vector<8x4xf32>
    tpu.vector_store %arg6[%c0_11, %c0_12], %12 {strides = array<i32>} : memref<8x4xf32, #tpu.memory_space<vmem>>, vector<8x4xf32>,
    return
  }
  func.func @transform_0(%arg0: i32) -> (i32, i32) {
    %c0_i32 = arith.constant 0 : i32
    %c0_i32_0 = arith.constant 0 : i32
    return %arg0, %c0_i32 : i32, i32
  }
  func.func @transform_1(%arg0: i32) -> (i32, i32) {
    %c0_i32 = arith.constant 0 : i32
    %c0_i32_0 = arith.constant 0 : i32
    %c0_i32_1 = arith.constant 0 : i32
    return %c0_i32, %c0_i32_0 : i32, i32
  }
  func.func @transform_2(%arg0: i32) -> (i32, i32) {
    %c0_i32 = arith.constant 0 : i32
    %c0_i32_0 = arith.constant 0 : i32
    %c0_i32_1 = arith.constant 0 : i32
    return %c0_i32, %c0_i32_0 : i32, i32
  }
  func.func @transform_3(%arg0: i32) -> (i32, i32) {
    %c0_i32 = arith.constant 0 : i32
    %c0_i32_0 = arith.constant 0 : i32
    %c0_i32_1 = arith.constant 0 : i32
    return %c0_i32, %c0_i32_0 : i32, i32
  }
  func.func @transform_4(%arg0: i32) -> (i32, i32) {
    %c0_i32 = arith.constant 0 : i32
    %c0_i32_0 = arith.constant 0 : i32
    %c0_i32_1 = arith.constant 0 : i32
    return %c0_i32, %c0_i32_0 : i32, i32
  }
  func.func @transform_5(%arg0: i32) -> (i32, i32) {
    %c0_i32 = arith.constant 0 : i32
    %c0_i32_0 = arith.constant 0 : i32
    return %arg0, %c0_i32 : i32, i32
  }
}

</mosaic_0001>

<llo_original>
// kernel: tpu_custom_call.1
$region0: #{tpu_custom_call.1}
  #allocation0 [shape = 'u32[]', space=smem, size = 0x4, offset = 0x4, fixed_abs, tag = 'smem constant byte address 0x4 - core index']
  #allocation1 [shape = 'u32[72,128]{1,0:T(1,128)}', space=vmem, size = 0x9000, scoped, tag = 'internal scratch']
  %s0 = inlined_call_operand.vmem [shape: f32[8,16], index: 0, kind: input, shape index: {}]
  %s1 = inlined_call_operand.vmem [shape: f32[16,64], index: 1, kind: input, shape index: {}]
  %s2 = inlined_call_operand.vmem [shape: f32[1,64], index: 2, kind: input, shape index: {}]
  %s3 = inlined_call_operand.vmem [shape: f32[64,4], index: 3, kind: input, shape index: {}]
  %s4 = inlined_call_operand.vmem [shape: f32[1,4], index: 4, kind: input, shape index: {}]
  %s5 = inlined_call_operand.vmem [shape: f32[8,4], index: 5, kind: output, shape index: {}]
  %s6 = sld [smem:[#allocation0]]
  $region30: #{tpu_custom_call.1} parent=0
    _
  %s8 = ssub.s32 1, %s6
  %s9 = scalar_select 0, %s8, %s6
  // Predicated region
  $region2: #{tpu_custom_call.1} parent=0 // pred_check
    _
  $region3: #{tpu_custom_call.1} parent=0 // pred_check_branch
    %11 = sbr.rel (0) target = $region5
  $region4: #{tpu_custom_call.1} parent=0 // pred_region
    _
  $region5: #{tpu_custom_call.1} parent=0 // pred_fallthru
    _
  // Predicated region
  $region6: #{tpu_custom_call.1} parent=0 // pred_check
    _
  $region7: #{tpu_custom_call.1} parent=0 // pred_check_branch
    %13 = sbr.rel (0) target = $region9
  $region8: #{tpu_custom_call.1} parent=0 // pred_region
    _
  $region9: #{tpu_custom_call.1} parent=0 // pred_fallthru
    _
  // Predicated region
  $region10: #{tpu_custom_call.1} parent=0 // pred_check
    _
  $region11: #{tpu_custom_call.1} parent=0 // pred_check_branch
    %15 = sbr.rel (0) target = $region13
  $region12: #{tpu_custom_call.1} parent=0 // pred_region
    _
  $region13: #{tpu_custom_call.1} parent=0 // pred_fallthru
    _
  // Predicated region
  $region14: #{tpu_custom_call.1} parent=0 // pred_check
    _
  $region15: #{tpu_custom_call.1} parent=0 // pred_check_branch
    %17 = sbr.rel (0) target = $region17
  $region16: #{tpu_custom_call.1} parent=0 // pred_region
    _
  $region17: #{tpu_custom_call.1} parent=0 // pred_fallthru
    _
  // Predicated region
  $region18: #{tpu_custom_call.1} parent=0 // pred_check
    _
  $region19: #{tpu_custom_call.1} parent=0 // pred_check_branch
    %19 = sbr.rel (0) target = $region21
  $region20: #{tpu_custom_call.1} parent=0 // pred_region
    _
  $region21: #{tpu_custom_call.1} parent=0 // pred_fallthru
    _
  %v20 = vld [vmem:[%s0] sm:$0xff]
  %v21 = vld [vmem:[%s1] sm:$0xff]
  %v22 = vld [vmem:[%s1 + $0x8] sm:$0xff]
  %v23 = vld [vmem:[%s2] sm:$0x1]
  %v25 = vperm.slane %v23, 0
  %vm27 = vcmask 130048
  %v29 = vsel %vm27, %v20, 0
  %31 = vmatpush.msra.mxu0 0.0
  %32 = vmatpush.msra.mxu0 0.0
  %33 = vmatpush.msra.mxu0 0.0
  %34 = vmatpush.msra.mxu0 0.0
  %35 = vmatpush.msra.mxu0 0.0
  %36 = vmatpush.msra.mxu0 0.0
  %37 = vmatpush.msra.mxu0 0.0
  %38 = vmatpush.msra.mxu0 0.0
  %39 = vmatpush.msra.mxu0 0.0
  %40 = vmatpush.msra.mxu0 0.0
  %41 = vmatpush.msra.mxu0 0.0
  %42 = vmatpush.msra.mxu0 0.0
  %43 = vmatpush.msra.mxu0 0.0
  %44 = vmatpush.msra.mxu0 0.0
  %45 = vmatpush.msra.mxu0 %v22
  %46 = vmatpush.msra.mxu0 %v21
  %47 = vmatmul.f32.gmra.mxu0 %v29
  %v48 = vpop.f32.mrf.mxu0
  %v49 = vadd.f32 %v25, %v48
  %50 = vdwg.mxu0
  %v51 = vmax.f32 %v49, 0.0
  %v52 = vld [vmem:[%s3] sm:$0xff]
  %v53 = vld [vmem:[%s3 + $0x8] sm:$0xff]
  %v54 = vld [vmem:[%s3 + $0x10] sm:$0xff]
  %v55 = vld [vmem:[%s3 + $0x18] sm:$0xff]
  %v56 = vld [vmem:[%s3 + $0x20] sm:$0xff]
  %v57 = vld [vmem:[%s3 + $0x28] sm:$0xff]
  %v58 = vld [vmem:[%s3 + $0x30] sm:$0xff]
  %v59 = vld [vmem:[%s3 + $0x38] sm:$0xff]
  %v60 = vld [vmem:[%s4] sm:$0x1]
  %v62 = vperm.slane %v60, 0
  %vm64 = vcmask 523264
  %v66 = vsel %vm64, %v51, 0
  %68 = vmatpush.msra.mxu0 0.0
  %69 = vmatpush.msra.mxu0 0.0
  %70 = vmatpush.msra.mxu0 0.0
  %71 = vmatpush.msra.mxu0 0.0
  %72 = vmatpush.msra.mxu0 0.0
  %73 = vmatpush.msra.mxu0 0.0
  %74 = vmatpush.msra.mxu0 0.0
  %75 = vmatpush.msra.mxu0 0.0
  %76 = vmatpush.msra.mxu0 %v59
  %77 = vmatpush.msra.mxu0 %v58
  %78 = vmatpush.msra.mxu0 %v57
  %79 = vmatpush.msra.mxu0 %v56
  %80 = vmatpush.msra.mxu0 %v55
  %81 = vmatpush.msra.mxu0 %v54
  %82 = vmatpush.msra.mxu0 %v53
  %83 = vmatpush.msra.mxu0 %v52
  %84 = vmatmul.f32.gmra.mxu0 %v66
  %v85 = vpop.f32.mrf.mxu0
  %v86 = vadd.f32 %v62, %v85
  %87 = vdwg.mxu0
  %vm88 = vcmask 31744
  %89 = vst.msk [vmem:[%s5] sm:$0xff] %vm88, %v86
  // Predicated region
  $region22: #{tpu_custom_call.1} parent=0 // pred_check
    _
  $region23: #{tpu_custom_call.1} parent=0 // pred_check_branch
    %91 = sbr.rel (0) target = $region25
  $region24: #{tpu_custom_call.1} parent=0 // pred_region
    _
  $region25: #{tpu_custom_call.1} parent=0 // pred_fallthru
    _
  // Predicated region
  $region26: #{tpu_custom_call.1} parent=0 // pred_check
    _
  $region27: #{tpu_custom_call.1} parent=0 // pred_check_branch
    %93 = sbr.rel (0) target = $region29
  $region28: #{tpu_custom_call.1} parent=0 // pred_region
    _
  $region29: #{tpu_custom_call.1} parent=0 // pred_fallthru
    _

</llo_original>
